<compile_context>
chip_gen: v7x
topology: tpu7x:2x2x1
jax: 0.10.0
libtpu: 0.0.40
codegen_flags: <defaults>
</compile_context>

<pallas_src>
import jax
import jax.numpy as jnp
from jax.experimental import pallas as pl
from jax.experimental.pallas import tpu as pltpu

_LANE = 128
_SUBLANE = 8
_TARGET_TILE_BYTES = 2 * 1024 * 1024    # ~2 MiB of x per grid step
_MIN_GRID_STEPS = 8                     # keep both v7x TCs busy and pipelined
_GRIDLESS_MAX_BYTES = 2 * 1024 * 1024   # below this, a single grid-less call


def _round_up(n, m):
    return ((n + m - 1) // m) * m


def _linear_kernel(x_ref, w_ref, b_ref, o_ref):
    # x_ref: (tm, D); w_ref: (D, C); b_ref: (1, C) f32; o_ref: (tm, C).
    acc = jnp.dot(x_ref[...], w_ref[...], preferred_element_type=jnp.float32)
    o_ref[...] = (acc + b_ref[...]).astype(o_ref.dtype)


def _vmem_budget_bytes():
    """Physical VMEM minus ~20% headroom for Mosaic-internal scratch."""
    try:
        cap = int(pltpu.get_tpu_info().vmem_capacity_bytes)
    except Exception:
        cap = 64 * 1024 * 1024  # conservative fallback (v7x per-TC VMEM)
    return int(cap * 0.8)


def _vmem_tile_f32_bytes(rows, cols):
    """VMEM footprint of one (rows, cols) f32 buffer, (8, 128)-padded."""
    return 4 * _round_up(max(rows, 1), _SUBLANE) * _round_up(max(cols, 1), _LANE)


def _grid_vmem_need(tm, num_dim, num_class):
    # BlockSpec double-buffers every operand (including the grid-resident
    # weight / bias blocks -- see TODO on pl.Buffered(1)).
    return 2 * (_vmem_tile_f32_bytes(tm, num_dim)            # x tile
                + _vmem_tile_f32_bytes(num_dim, num_class)   # resident W (D,C)
                + _vmem_tile_f32_bytes(1, num_class)         # resident bias
                + _vmem_tile_f32_bytes(tm, num_class))       # output tile


def _pick_batch_tile(batch, num_dim, num_class, budget):
    d_vmem = _round_up(num_dim, _LANE)
    # ~2 MiB of x per grid step amortizes the ~0.35us per-step overhead.
    tm = _round_up(max(_TARGET_TILE_BYTES // (4 * d_vmem), _SUBLANE), _SUBLANE)
    # Shrink until the lane/sublane-padded footprint fits the VMEM budget.
    while tm > _SUBLANE and _grid_vmem_need(tm, num_dim, num_class) > budget:
        tm = max(_SUBLANE, _round_up(tm // 2, _SUBLANE))
    # Keep >= _MIN_GRID_STEPS steps when the batch allows it so both v7x TCs
    # get several steps each and DMA stays overlapped on both cores.
    tm_for_steps = _round_up(pl.cdiv(batch, _MIN_GRID_STEPS), _SUBLANE)
    return max(_SUBLANE, min(tm, tm_for_steps))


def logistic_regression_forward(x, weight, bias, *,
                                compute_dtype=None,
                                gridless_max_bytes=_GRIDLESS_MAX_BYTES):
    """logits = x @ weight.T + bias (PyTorch nn.Linear semantics), Pallas TPU."""
    batch, num_dim = x.shape
    num_class, wd = weight.shape
    assert wd == num_dim and bias.shape == (num_class,)

    out_dtype = x.dtype
    # One-time transpose to (D, C): in-kernel contraction is a plain
    # (M, K) @ (K, N) MXU matmul, no per-step transpose of the resident W.
    w_t = weight.T
    if compute_dtype is not None:
        x = x.astype(compute_dtype)
        w_t = w_t.astype(compute_dtype)
    # Bias / epilogue kept in f32 (accumulation is f32; v5e has no bf16 VPU).
    b2d = bias.astype(jnp.float32).reshape(1, num_class)

    budget = _vmem_budget_bytes()
    cost = pl.CostEstimate(
        flops=2 * batch * num_dim * num_class,
        transcendentals=0,
        bytes_accessed=int(x.dtype.itemsize * batch * num_dim
                           + w_t.dtype.itemsize * num_dim * num_class
                           + 4 * num_class
                           + jnp.dtype(out_dtype).itemsize * batch * num_class),
    )

    # ---------- grid-less path: everything resident in VMEM, zero per-step
    # pipeline overhead.  Gated on lane-padded VMEM bytes, not rows. ----------
    small_need = (_vmem_tile_f32_bytes(batch, num_dim)
                  + _vmem_tile_f32_bytes(num_dim, num_class)
                  + _vmem_tile_f32_bytes(1, num_class)
                  + _vmem_tile_f32_bytes(batch, num_class))
    if small_need <= min(gridless_max_bytes, budget):
        vmem_spec = pl.BlockSpec(memory_space=pltpu.MemorySpace.VMEM)
        return pl.pallas_call(
            _linear_kernel,
            out_shape=jax.ShapeDtypeStruct((batch, num_class), out_dtype),
            in_specs=[vmem_spec, vmem_spec, vmem_spec],
            out_specs=vmem_spec,
            compiler_params=pltpu.CompilerParams(
                vmem_limit_bytes=int(min(budget,
                                         max(2 * small_need, 4 * 1024 * 1024)))),
            cost_estimate=cost,
        )(x, w_t, b2d)

    # ---------- batch-tiled path: 1-D grid over batch tiles; weight/bias stay
    # VMEM-resident (constant block index -> DMA'd once). ----------
    tm = _pick_batch_tile(batch, num_dim, num_class, budget)
    grid = (pl.cdiv(batch, tm),)   # ragged edge handled by Pallas (masked store)
    vmem_need = _grid_vmem_need(tm, num_dim, num_class)
    vmem_limit = int(min(budget, max(2 * vmem_need, 8 * 1024 * 1024)))

    return pl.pallas_call(
        _linear_kernel,
        out_shape=jax.ShapeDtypeStruct((batch, num_class), out_dtype),
        grid_spec=pltpu.PrefetchScalarGridSpec(
            num_scalar_prefetch=0,
            grid=grid,
            in_specs=[
                pl.BlockSpec((tm, num_dim), lambda i: (i, 0)),
                pl.BlockSpec((num_dim, num_class), lambda i: (0, 0)),  # resident W
                pl.BlockSpec((1, num_class), lambda i: (0, 0)),        # resident b
            ],
            out_specs=pl.BlockSpec((tm, num_class), lambda i: (i, 0)),
        ),
        compiler_params=pltpu.CompilerParams(
            dimension_semantics=("parallel",),   # shard batch tiles across TCs
            vmem_limit_bytes=vmem_limit,
        ),
        cost_estimate=cost,
    )(x, w_t, b2d)


if __name__ == "__main__":
    # Module: LogisticRegression(num_dim, num_class); forward ignores `g`.
    num_dim, num_class = 32, 8

    key = jax.random.PRNGKey(0)
    kx, kw, kb, kx2, kx3 = jax.random.split(key, 5)

    # Deterministic synthetic parameters (nn.Linear shapes: W (C, D), b (C,)).
    weight = jax.random.normal(kw, (num_class, num_dim), dtype=jnp.float32) * 0.1
    bias = jax.random.normal(kb, (num_class,), dtype=jnp.float32) * 0.1

    # 1) Small batch -> grid-less fully-VMEM path.
    x_small = jax.random.normal(kx, (16, num_dim), dtype=jnp.float32)
    out_small = jax.block_until_ready(
        logistic_regression_forward(x_small, weight, bias))
    ref_small = x_small @ weight.T + bias
    assert out_small.shape == (16, num_class)
    assert jnp.allclose(out_small, ref_small, atol=1e-5, rtol=1e-5)

    # 2) Batch-tiled grid path (forced by disabling the grid-less gate),
    #    batch divisible by the chosen tile.
    x_big = jax.random.normal(kx2, (1024, num_dim), dtype=jnp.float32)
    out_big = jax.block_until_ready(
        logistic_regression_forward(x_big, weight, bias, gridless_max_bytes=0))
    ref_big = x_big @ weight.T + bias
    assert out_big.shape == (1024, num_class)
    assert jnp.allclose(out_big, ref_big, atol=1e-4, rtol=1e-5)

    # 3) Ragged batch (not a multiple of the tile) -> boundary-block masking.
    x_rag = jax.random.normal(kx3, (1000, num_dim), dtype=jnp.float32)
    out_rag = jax.block_until_ready(
        logistic_regression_forward(x_rag, weight, bias, gridless_max_bytes=0))
    ref_rag = x_rag @ weight.T + bias
    assert out_rag.shape == (1000, num_class)
    assert jnp.allclose(out_rag, ref_rag, atol=1e-4, rtol=1e-5)

    # 4) Optional bf16-input path (f32 accumulation), looser tolerance.
    out_bf16 = jax.block_until_ready(
        logistic_regression_forward(x_big, weight, bias,
                                    compute_dtype=jnp.bfloat16,
                                    gridless_max_bytes=0))
    assert out_bf16.shape == (1024, num_class)
    assert out_bf16.dtype == x_big.dtype
    assert jnp.allclose(out_bf16, ref_big, atol=5e-2, rtol=5e-2)

    print("KERNEL_OK")
</pallas_src>

<mosaic_0001>
module attributes {stable_mosaic.version = 11 : i64} {
  func.func @_linear_kernel(%arg0: memref<16x32xf32, #tpu.memory_space<vmem>>, %arg1: memref<32x8xf32, #tpu.memory_space<vmem>>, %arg2: memref<1x8xf32, #tpu.memory_space<vmem>>, %arg3: memref<16x8xf32, #tpu.memory_space<vmem>>) attributes {dimension_semantics = [], scalar_prefetch = 0 : i64, scratch_operands = 0 : i64, tpu.core_type = #tpu.core_type<tc>} {
    %c0 = arith.constant 0 : index
    %c0_0 = arith.constant 0 : index
    %0 = vector.load %arg0[%c0, %c0_0] : memref<16x32xf32, #tpu.memory_space<vmem>>, vector<16x32xf32>
    %c0_1 = arith.constant 0 : index
    %c0_2 = arith.constant 0 : index
    %1 = vector.load %arg1[%c0_1, %c0_2] : memref<32x8xf32, #tpu.memory_space<vmem>>, vector<32x8xf32>
    %cst = arith.constant dense<0.000000e+00> : vector<16x8xf32>
    %2 = tpu.matmul %0, %1, %cst {dimension_numbers = #tpu.dot_dimension_numbers<[1], [0], [0], [1], [0, 0, 1, 1], [], []>} : vector<16x32xf32>, vector<32x8xf32>, vector<16x8xf32> -> vector<16x8xf32>
    %c0_3 = arith.constant 0 : index
    %c0_4 = arith.constant 0 : index
    %3 = vector.load %arg2[%c0_3, %c0_4] : memref<1x8xf32, #tpu.memory_space<vmem>>, vector<1x8xf32>
    %4 = vector.broadcast %3 : vector<1x8xf32> to vector<16x8xf32>
    %5 = arith.addf %2, %4 : vector<16x8xf32>
    %c0_5 = arith.constant 0 : index
    %c0_6 = arith.constant 0 : index
    %6 = vector.load %arg3[%c0_5, %c0_6] : memref<16x8xf32, #tpu.memory_space<vmem>>, vector<16x8xf32>
    tpu.vector_store %arg3[%c0_5, %c0_6], %5 {strides = array<i32>} : memref<16x8xf32, #tpu.memory_space<vmem>>, vector<16x8xf32>,
    return
  }
}

</mosaic_0001>

<llo_original>
// kernel: tpu_custom_call.1
$region0: #{tpu_custom_call.1}
  #allocation0 [shape = 'u32[]', space=smem, size = 0x4, offset = 0x4, fixed_abs, tag = 'smem constant byte address 0x4 - core index']
  #allocation1 [shape = 'u32[144,128]{1,0:T(1,128)}', space=vmem, size = 0x12000, scoped, tag = 'internal scratch']
  %s0 = inlined_call_operand.vmem [shape: f32[16,32], index: 0, kind: input, shape index: {}]
  %s1 = inlined_call_operand.vmem [shape: f32[32,8], index: 1, kind: input, shape index: {}]
  %s2 = inlined_call_operand.vmem [shape: f32[1,8], index: 2, kind: input, shape index: {}]
  %s3 = inlined_call_operand.vmem [shape: f32[16,8], index: 3, kind: output, shape index: {}]
  %s4 = sld [smem:[#allocation0]]
  $region22: #{tpu_custom_call.1} parent=0
    _
  %s6 = ssub.s32 1, %s4
  %s7 = scalar_select 0, %s6, %s4
  // Predicated region
  $region2: #{tpu_custom_call.1} parent=0 // pred_check
    _
  $region3: #{tpu_custom_call.1} parent=0 // pred_check_branch
    %9 = sbr.rel (0) target = $region5
  $region4: #{tpu_custom_call.1} parent=0 // pred_region
    _
  $region5: #{tpu_custom_call.1} parent=0 // pred_fallthru
    _
  // Predicated region
  $region6: #{tpu_custom_call.1} parent=0 // pred_check
    _
  $region7: #{tpu_custom_call.1} parent=0 // pred_check_branch
    %11 = sbr.rel (0) target = $region9
  $region8: #{tpu_custom_call.1} parent=0 // pred_region
    _
  $region9: #{tpu_custom_call.1} parent=0 // pred_fallthru
    _
  // Predicated region
  $region10: #{tpu_custom_call.1} parent=0 // pred_check
    _
  $region11: #{tpu_custom_call.1} parent=0 // pred_check_branch
    %13 = sbr.rel (0) target = $region13
  $region12: #{tpu_custom_call.1} parent=0 // pred_region
    _
  $region13: #{tpu_custom_call.1} parent=0 // pred_fallthru
    _
  %v14 = vld [vmem:[%s0] sm:$0xff]
  %v15 = vld [vmem:[%s0 + $0x8] sm:$0xff]
  %v16 = vld [vmem:[%s1] sm:$0xff]
  %v17 = vld [vmem:[%s1 + $0x8] sm:$0xff]
  %v18 = vld [vmem:[%s1 + $0x10] sm:$0xff]
  %v19 = vld [vmem:[%s1 + $0x18] sm:$0xff]
  %v20 = vld [vmem:[%s2] sm:$0x1]
  %v22 = vlaneseq
  %v23 = vshrl.u32 %v22, 7
  %v24 = vsub.s32 0, %v23
  %v25 = vrot.slane %v20, %v24
  %vm27 = vcmask 261120
  %v29 = vsel %vm27, %v14, 0
  %v32 = vsel %vm27, %v15, 0
  %34 = vmatprep.subr.mxu0 0.0
  %35 = vmatpush1.msra.mxu0 %v16
  %36 = vmatprep.subr.mxu0 0.0
  %37 = vmatpush1.msra.mxu0 %v17
  %38 = vmatprep.subr.mxu0 0.0
  %39 = vmatpush1.msra.mxu0 %v18
  %40 = vmatprep.subr.mxu0 0.0
  %41 = vmatpush1.msra.mxu0 %v19
  %42 = vmatprep.subr.mxu0 0.0
  %43 = vmatpush1.msra.mxu0 0.0
  %44 = vmatprep.subr.mxu0 0.0
  %45 = vmatpush1.msra.mxu0 0.0
  %46 = vmatprep.subr.mxu0 0.0
  %47 = vmatpush1.msra.mxu0 0.0
  %48 = vmatprep.subr.mxu0 0.0
  %49 = vmatpush1.msra.mxu0 0.0
  %50 = vmatprep.subr.mxu0 0.0
  %51 = vmatpush1.msra.mxu0 0.0
  %52 = vmatprep.subr.mxu0 0.0
  %53 = vmatpush1.msra.mxu0 0.0
  %54 = vmatprep.subr.mxu0 0.0
  %55 = vmatpush1.msra.mxu0 0.0
  %56 = vmatprep.subr.mxu0 0.0
  %57 = vmatpush1.msra.mxu0 0.0
  %58 = vmatprep.subr.mxu0 0.0
  %59 = vmatpush1.msra.mxu0 0.0
  %60 = vmatprep.subr.mxu0 0.0
  %61 = vmatpush1.msra.mxu0 0.0
  %62 = vmatprep.subr.mxu0 0.0
  %63 = vmatpush1.msra.mxu0 0.0
  %64 = vmatprep.subr.mxu0 0.0
  %65 = vmatpush1.msra.mxu0 0.0
  %66 = vmatprep.subr.mxu0 0.0
  %67 = vmatpush1.msra.mxu0 0.0
  %68 = vmatprep.subr.mxu0 0.0
  %69 = vmatpush1.msra.mxu0 0.0
  %70 = vmatprep.subr.mxu0 0.0
  %71 = vmatpush1.msra.mxu0 0.0
  %72 = vmatprep.subr.mxu0 0.0
  %73 = vmatpush1.msra.mxu0 0.0
  %74 = vmatprep.subr.mxu0 0.0
  %75 = vmatpush1.msra.mxu0 0.0
  %76 = vmatprep.subr.mxu0 0.0
  %77 = vmatpush1.msra.mxu0 0.0
  %78 = vmatprep.subr.mxu0 0.0
  %79 = vmatpush1.msra.mxu0 0.0
  %80 = vmatprep.subr.mxu0 0.0
  %81 = vmatpush1.msra.mxu0 0.0
  %82 = vmatprep.subr.mxu0 0.0
  %83 = vmatpush1.msra.mxu0 0.0
  %84 = vmatprep.subr.mxu0 0.0
  %85 = vmatpush1.msra.mxu0 0.0
  %86 = vmatprep.subr.mxu0 0.0
  %87 = vmatpush1.msra.mxu0 0.0
  %88 = vmatprep.subr.mxu0 0.0
  %89 = vmatpush1.msra.mxu0 0.0
  %90 = vmatprep.subr.mxu0 0.0
  %91 = vmatpush1.msra.mxu0 0.0
  %92 = vmatprep.subr.mxu0 0.0
  %93 = vmatpush1.msra.mxu0 0.0
  %94 = vmatprep.subr.mxu0 0.0
  %95 = vmatpush1.msra.mxu0 0.0
  %96 = vmatprep.subr.mxu0 0.0
  %97 = vmatpush1.msra.mxu0 0.0
  %98 = vmatprep.mubr.f32.mxu0 0.0
  %99 = vmatmul.mubr.f32.gmra.mrb[0].mxu0 %v29
  %v100 = vpop.f32.mrb[0].mxu0
  %v101 = vadd.f32 %v25, %v100
  %v102 = vpop.f32.mrb[0].mxu0
  %103 = vmatprep.mubr.f32.mxu0 0.0
  %104 = vmatmul.mubr.f32.gmra.mrb[0].mxu0 %v32
  %v105 = vpop.f32.mrb[0].mxu0
  %v106 = vadd.f32 %v25, %v105
  %v107 = vpop.f32.mrb[0].mxu0
  %108 = vdwg.mxu0
  %vm109 = vcmask 64512
  %110 = vst.msk [vmem:[%s3] sm:$0xff] %vm109, %v101
  %111 = vst.msk [vmem:[%s3 + $0x8] sm:$0xff] %vm109, %v106
  // Predicated region
  $region14: #{tpu_custom_call.1} parent=0 // pred_check
    _
  $region15: #{tpu_custom_call.1} parent=0 // pred_check_branch
    %113 = sbr.rel (0) target = $region17
  $region16: #{tpu_custom_call.1} parent=0 // pred_region
    _
  $region17: #{tpu_custom_call.1} parent=0 // pred_fallthru
    _
  // Predicated region
  $region18: #{tpu_custom_call.1} parent=0 // pred_check
    _
  $region19: #{tpu_custom_call.1} parent=0 // pred_check_branch
    %115 = sbr.rel (0) target = $region21
  $region20: #{tpu_custom_call.1} parent=0 // pred_region
    _
  $region21: #{tpu_custom_call.1} parent=0 // pred_fallthru
    _

</llo_original>
